<compile_context>
chip_gen: v6e
topology: v6e:2x2x1
jax: 0.10.0
libtpu: 0.0.40
codegen_flags: <defaults>
</compile_context>

<pallas_src>
import functools

import jax
import jax.numpy as jnp
from jax.experimental import pallas as pl
from jax.experimental.pallas import tpu as pltpu

LANES = 128            # vreg lane width
SUBLANES = 8           # vreg sublane count (f32)
MAX_BLOCK_ROWS = 2048  # 2048 x 128 x 4B = 1 MiB per input block
NUM_METRICS = 6        # l1, l2, mrse, mape, smape, clipped-mse (for psnr)
EPS = 0.01


def _metric_sums_kernel(p_ref, g_ref, acc_ref, *,
                        rows, block_rows, steps, needs_mask):
    """Grid = (cores 'parallel', steps 'arbitrary') over row-blocks.

    acc_ref: (NUM_METRICS, 8, 128) f32 output block (same block across the
    reduction axis -> resident VMEM accumulator; one block per core).
    """
    j = pl.program_id(1)

    @pl.when(j == 0)
    def _():
        acc_ref[...] = jnp.zeros_like(acc_ref)

    p = p_ref[...]
    g = g_ref[...]

    if needs_mask:
        # Zero out rows beyond the real extent (partial / duplicated blocks).
        # With p = g = 0 every metric's contribution is exactly 0
        # (diff = 0, all denominators >= eps).
        c = pl.program_id(0)
        row_start = (c * steps + j) * block_rows
        local_row = jax.lax.broadcasted_iota(
            jnp.int32, (block_rows, LANES), 0)
        valid = (row_start + local_row) < rows
        p = jnp.where(valid, p, 0.0)
        g = jnp.where(valid, g, 0.0)

    d = g - p
    ad = jnp.abs(d)
    d2 = d * d
    dclip = jnp.clip(g, 0.0, 1.0) - jnp.clip(p, 0.0, 1.0)

    maps = (
        ad,                           # l1
        d2,                           # l2
        d2 / (g * g + EPS),           # mrse
        ad / (g + EPS),               # mape
        2.0 * ad / (g + p + EPS),     # smape
        dclip * dclip,                # clipped mse (psnr)
    )
    for m, lm in enumerate(maps):
        # (block_rows, 128) -> (block_rows//8, 8, 128); sum over axis 0 is
        # pure element-wise VPU adds across vregs (no XLU, no SMEM scalar RMW).
        part = jnp.sum(
            lm.reshape(block_rows // SUBLANES, SUBLANES, LANES), axis=0)
        acc_ref[m] += part


def _pallas_metric_sums(p2, g2):
    """p2, g2: (rows, 128) f32 with rows % 8 == 0. Returns (6,) f32 sums."""
    rows = p2.shape[0]
    block_rows = min(MAX_BLOCK_ROWS, rows)
    num_blocks = pl.cdiv(rows, block_rows)
    num_cores = 2 if num_blocks >= 2 else 1       # let v7x use both TCs
    steps = pl.cdiv(num_blocks, num_cores)
    needs_mask = (num_blocks * block_rows != rows) or \
                 (num_cores * steps != num_blocks)

    kernel = functools.partial(
        _metric_sums_kernel,
        rows=rows, block_rows=block_rows, steps=steps, needs_mask=needs_mask)

    def in_map(c, j):
        # Clamp so duplicated (fully-masked) trailing steps never index past
        # the array; their contribution is zeroed in-kernel.
        return (jnp.minimum(c * steps + j, num_blocks - 1), 0)

    out = pl.pallas_call(
        kernel,
        out_shape=jax.ShapeDtypeStruct(
            (num_cores, NUM_METRICS, SUBLANES, LANES), jnp.float32),
        grid_spec=pltpu.PrefetchScalarGridSpec(
            num_scalar_prefetch=0,
            grid=(num_cores, steps),
            in_specs=[
                pl.BlockSpec((block_rows, LANES), in_map),
                pl.BlockSpec((block_rows, LANES), in_map),
            ],
            out_specs=pl.BlockSpec(
                (None, NUM_METRICS, SUBLANES, LANES),
                lambda c, j: (c, 0, 0, 0)),
        ),
        compiler_params=pltpu.CompilerParams(
            dimension_semantics=("parallel", "arbitrary"),
            vmem_limit_bytes=32 * 1024 * 1024),
    )(p2, g2)

    # Final cross-core / cross-sublane / cross-lane reduce (tiny) in XLA.
    return jnp.sum(out, axis=(0, 2, 3))


def _metric_sums_jnp(p, g):
    """Plain-jnp sums for the (< 8*128 element) tail."""
    d = g - p
    ad = jnp.abs(d)
    d2 = d * d
    dc = jnp.clip(g, 0.0, 1.0) - jnp.clip(p, 0.0, 1.0)
    return jnp.stack([
        jnp.sum(ad),
        jnp.sum(d2),
        jnp.sum(d2 / (g * g + EPS)),
        jnp.sum(ad / (g + EPS)),
        jnp.sum(2.0 * ad / (g + p + EPS)),
        jnp.sum(dc * dc),
    ])


def all_metrics(pred, gt):
    """Pallas implementation of AllMetrics.forward(pred, gt) per-call metrics."""
    assert pred.shape == gt.shape, "pred/gt must have the same shape"
    # TODO(synk): for native bf16 inputs, stream bf16 and cast in-kernel to
    # halve HBM traffic; test inputs here are already f32 (cast is a no-op).
    p = pred.reshape(-1).astype(jnp.float32)
    g = gt.reshape(-1).astype(jnp.float32)
    n = p.shape[0]

    tile = SUBLANES * LANES
    n_main = (n // tile) * tile     # divisible prefix -> Pallas (zero-copy reshape)

    sums = jnp.zeros((NUM_METRICS,), jnp.float32)
    if n_main > 0:
        p_main = p if n_main == n else p[:n_main]
        g_main = g if n_main == n else g[:n_main]
        rows = n_main // LANES
        sums = sums + _pallas_metric_sums(
            p_main.reshape(rows, LANES), g_main.reshape(rows, LANES))
    if n_main < n:
        sums = sums + _metric_sums_jnp(p[n_main:], g[n_main:])

    inv_n = jnp.float32(1.0 / n)
    l1, l2, mrse, mape, smape, mse_clip = [sums[i] * inv_n for i in range(6)]
    psnr = 20.0 * jnp.log10(1.0 / jnp.sqrt(mse_clip))
    return {"l1": l1, "l2": l2, "mrse": mrse, "mape": mape,
            "smape": smape, "psnr": psnr}


def _reference(pred, gt):
    pred = pred.astype(jnp.float32)
    gt = gt.astype(jnp.float32)
    diff = gt - pred
    return {
        "l1": jnp.abs(diff).mean(),
        "l2": (diff * diff).mean(),
        "mrse": (diff * diff / (gt * gt + EPS)).mean(),
        "mape": (jnp.abs(diff) / (gt + EPS)).mean(),
        "smape": (2.0 * jnp.abs(diff) / (gt + pred + EPS)).mean(),
        "psnr": 20.0 * jnp.log10(1.0 / jnp.sqrt(
            ((jnp.clip(gt, 0, 1) - jnp.clip(pred, 0, 1)) ** 2).mean())),
    }


if __name__ == "__main__":
    key = jax.random.PRNGKey(0)
    k1, k2 = jax.random.split(key)
    # Small NCHW image-like inputs consistent with an image-metrics module.
    shape = (2, 4, 16, 16)
    pred = jax.random.uniform(k1, shape, dtype=jnp.float32)
    gt = jax.random.uniform(k2, shape, dtype=jnp.float32)

    got = jax.block_until_ready(all_metrics(pred, gt))
    ref = jax.block_until_ready(_reference(pred, gt))

    for name in ref:
        assert jnp.allclose(got[name], ref[name], rtol=1e-5, atol=1e-6), (
            name, got[name], ref[name])
    print("KERNEL_OK")
</pallas_src>

<mosaic_0001>
module attributes {stable_mosaic.version = 11 : i64} {
  func.func @_metric_sums_kernel(%arg0: i32, %arg1: i32, %arg2: memref<16x128xf32, #tpu.memory_space<vmem>>, %arg3: memref<16x128xf32, #tpu.memory_space<vmem>>, %arg4: memref<1x6x8x128xf32, #tpu.memory_space<vmem>>) attributes {dimension_semantics = [#tpu.dimension_semantics<parallel>, #tpu.dimension_semantics<arbitrary>], iteration_bounds = array<i64: 1, 1>, scalar_prefetch = 0 : i64, scratch_operands = 0 : i64, tpu.core_type = #tpu.core_type<tc>, window_params = [{transform_indices = @transform_0, window_bounds = array<i64: 16, 128>}, {transform_indices = @transform_1, window_bounds = array<i64: 16, 128>}, {transform_indices = @transform_2, window_bounds = array<i64: 1, 6, 8, 128>}]} {
    %c0_i32 = arith.constant 0 : i32
    %0 = arith.cmpi eq, %arg1, %c0_i32 : i32
    %1 = arith.extui %0 : i1 to i32
    %c0_i32_0 = arith.constant 0 : i32
    %2 = arith.cmpi ne, %1, %c0_i32_0 : i32
    scf.if %2 {
      %cst_60 = arith.constant 0.000000e+00 : f32
      %79 = vector.broadcast %cst_60 : f32 to vector<6x8x128xf32>
      %c0_61 = arith.constant 0 : index
      %c0_62 = arith.constant 0 : index
      %c0_63 = arith.constant 0 : index
      %c0_64 = arith.constant 0 : index
      %80 = vector.load %arg4[%c0_61, %c0_62, %c0_63, %c0_64] : memref<1x6x8x128xf32, #tpu.memory_space<vmem>>, vector<1x6x8x128xf32>
      %81 = vector.shape_cast %80 : vector<1x6x8x128xf32> to vector<6x8x128xf32>
      %82 = vector.shape_cast %79 : vector<6x8x128xf32> to vector<1x6x8x128xf32>
      tpu.vector_store %arg4[%c0_61, %c0_62, %c0_63, %c0_64], %82 {strides = array<i32>} : memref<1x6x8x128xf32, #tpu.memory_space<vmem>>, vector<1x6x8x128xf32>,
    } else {
    }
    %c0 = arith.constant 0 : index
    %c0_1 = arith.constant 0 : index
    %3 = vector.load %arg2[%c0, %c0_1] : memref<16x128xf32, #tpu.memory_space<vmem>>, vector<16x128xf32>
    %c0_2 = arith.constant 0 : index
    %c0_3 = arith.constant 0 : index
    %4 = vector.load %arg3[%c0_2, %c0_3] : memref<16x128xf32, #tpu.memory_space<vmem>>, vector<16x128xf32>
    %5 = arith.subf %4, %3 : vector<16x128xf32>
    %6 = math.absf %5 : vector<16x128xf32>
    %7 = arith.mulf %5, %5 : vector<16x128xf32>
    %cst = arith.constant 0.000000e+00 : f32
    %cst_4 = arith.constant 1.000000e+00 : f32
    %8 = vector.broadcast %cst : f32 to vector<16x128xf32>
    %9 = arith.maximumf %8, %4 : vector<16x128xf32>
    %10 = vector.broadcast %cst_4 : f32 to vector<16x128xf32>
    %11 = arith.minimumf %10, %9 : vector<16x128xf32>
    %cst_5 = arith.constant 0.000000e+00 : f32
    %cst_6 = arith.constant 1.000000e+00 : f32
    %12 = vector.broadcast %cst_5 : f32 to vector<16x128xf32>
    %13 = arith.maximumf %12, %3 : vector<16x128xf32>
    %14 = vector.broadcast %cst_6 : f32 to vector<16x128xf32>
    %15 = arith.minimumf %14, %13 : vector<16x128xf32>
    %16 = arith.subf %11, %15 : vector<16x128xf32>
    %17 = arith.mulf %4, %4 : vector<16x128xf32>
    %cst_7 = arith.constant 0.00999999977 : f32
    %18 = vector.broadcast %cst_7 : f32 to vector<16x128xf32>
    %19 = arith.addf %17, %18 : vector<16x128xf32>
    %20 = arith.divf %7, %19 : vector<16x128xf32>
    %cst_8 = arith.constant 0.00999999977 : f32
    %21 = vector.broadcast %cst_8 : f32 to vector<16x128xf32>
    %22 = arith.addf %4, %21 : vector<16x128xf32>
    %23 = arith.divf %6, %22 : vector<16x128xf32>
    %cst_9 = arith.constant 2.000000e+00 : f32
    %24 = vector.broadcast %cst_9 : f32 to vector<16x128xf32>
    %25 = arith.mulf %24, %6 : vector<16x128xf32>
    %26 = arith.addf %4, %3 : vector<16x128xf32>
    %cst_10 = arith.constant 0.00999999977 : f32
    %27 = vector.broadcast %cst_10 : f32 to vector<16x128xf32>
    %28 = arith.addf %26, %27 : vector<16x128xf32>
    %29 = arith.divf %25, %28 : vector<16x128xf32>
    %30 = arith.mulf %16, %16 : vector<16x128xf32>
    %31 = vector.shape_cast %6 : vector<16x128xf32> to vector<2x8x128xf32>
    %cst_11 = arith.constant dense<0.000000e+00> : vector<8x128xf32>
    %32 = vector.multi_reduction <add>, %31, %cst_11 [0] : vector<2x8x128xf32> to vector<8x128xf32>
    %c0_12 = arith.constant 0 : index
    %c0_13 = arith.constant 0 : index
    %c0_14 = arith.constant 0 : index
    %c0_15 = arith.constant 0 : index
    %33 = vector.load %arg4[%c0_12, %c0_13, %c0_14, %c0_15] : memref<1x6x8x128xf32, #tpu.memory_space<vmem>>, vector<1x1x8x128xf32>
    %34 = vector.shape_cast %33 : vector<1x1x8x128xf32> to vector<8x128xf32>
    %35 = arith.addf %34, %32 : vector<8x128xf32>
    %c0_16 = arith.constant 0 : index
    %c0_17 = arith.constant 0 : index
    %c0_18 = arith.constant 0 : index
    %c0_19 = arith.constant 0 : index
    %36 = vector.load %arg4[%c0_16, %c0_17, %c0_18, %c0_19] : memref<1x6x8x128xf32, #tpu.memory_space<vmem>>, vector<1x1x8x128xf32>
    %37 = vector.shape_cast %36 : vector<1x1x8x128xf32> to vector<8x128xf32>
    %38 = vector.shape_cast %35 : vector<8x128xf32> to vector<1x1x8x128xf32>
    tpu.vector_store %arg4[%c0_16, %c0_17, %c0_18, %c0_19], %38 {strides = array<i32>} : memref<1x6x8x128xf32, #tpu.memory_space<vmem>>, vector<1x1x8x128xf32>,
    %39 = vector.shape_cast %7 : vector<16x128xf32> to vector<2x8x128xf32>
    %cst_20 = arith.constant dense<0.000000e+00> : vector<8x128xf32>
    %40 = vector.multi_reduction <add>, %39, %cst_20 [0] : vector<2x8x128xf32> to vector<8x128xf32>
    %c0_21 = arith.constant 0 : index
    %c1 = arith.constant 1 : index
    %c0_22 = arith.constant 0 : index
    %c0_23 = arith.constant 0 : index
    %41 = vector.load %arg4[%c0_21, %c1, %c0_22, %c0_23] : memref<1x6x8x128xf32, #tpu.memory_space<vmem>>, vector<1x1x8x128xf32>
    %42 = vector.shape_cast %41 : vector<1x1x8x128xf32> to vector<8x128xf32>
    %43 = arith.addf %42, %40 : vector<8x128xf32>
    %c0_24 = arith.constant 0 : index
    %c1_25 = arith.constant 1 : index
    %c0_26 = arith.constant 0 : index
    %c0_27 = arith.constant 0 : index
    %44 = vector.load %arg4[%c0_24, %c1_25, %c0_26, %c0_27] : memref<1x6x8x128xf32, #tpu.memory_space<vmem>>, vector<1x1x8x128xf32>
    %45 = vector.shape_cast %44 : vector<1x1x8x128xf32> to vector<8x128xf32>
    %46 = vector.shape_cast %43 : vector<8x128xf32> to vector<1x1x8x128xf32>
    tpu.vector_store %arg4[%c0_24, %c1_25, %c0_26, %c0_27], %46 {strides = array<i32>} : memref<1x6x8x128xf32, #tpu.memory_space<vmem>>, vector<1x1x8x128xf32>,
    %47 = vector.shape_cast %20 : vector<16x128xf32> to vector<2x8x128xf32>
    %cst_28 = arith.constant dense<0.000000e+00> : vector<8x128xf32>
    %48 = vector.multi_reduction <add>, %47, %cst_28 [0] : vector<2x8x128xf32> to vector<8x128xf32>
    %c0_29 = arith.constant 0 : index
    %c2 = arith.constant 2 : index
    %c0_30 = arith.constant 0 : index
    %c0_31 = arith.constant 0 : index
    %49 = vector.load %arg4[%c0_29, %c2, %c0_30, %c0_31] : memref<1x6x8x128xf32, #tpu.memory_space<vmem>>, vector<1x1x8x128xf32>
    %50 = vector.shape_cast %49 : vector<1x1x8x128xf32> to vector<8x128xf32>
    %51 = arith.addf %50, %48 : vector<8x128xf32>
    %c0_32 = arith.constant 0 : index
    %c2_33 = arith.constant 2 : index
    %c0_34 = arith.constant 0 : index
    %c0_35 = arith.constant 0 : index
    %52 = vector.load %arg4[%c0_32, %c2_33, %c0_34, %c0_35] : memref<1x6x8x128xf32, #tpu.memory_space<vmem>>, vector<1x1x8x128xf32>
    %53 = vector.shape_cast %52 : vector<1x1x8x128xf32> to vector<8x128xf32>
    %54 = vector.shape_cast %51 : vector<8x128xf32> to vector<1x1x8x128xf32>
    tpu.vector_store %arg4[%c0_32, %c2_33, %c0_34, %c0_35], %54 {strides = array<i32>} : memref<1x6x8x128xf32, #tpu.memory_space<vmem>>, vector<1x1x8x128xf32>,
    %55 = vector.shape_cast %23 : vector<16x128xf32> to vector<2x8x128xf32>
    %cst_36 = arith.constant dense<0.000000e+00> : vector<8x128xf32>
    %56 = vector.multi_reduction <add>, %55, %cst_36 [0] : vector<2x8x128xf32> to vector<8x128xf32>
    %c0_37 = arith.constant 0 : index
    %c3 = arith.constant 3 : index
    %c0_38 = arith.constant 0 : index
    %c0_39 = arith.constant 0 : index
    %57 = vector.load %arg4[%c0_37, %c3, %c0_38, %c0_39] : memref<1x6x8x128xf32, #tpu.memory_space<vmem>>, vector<1x1x8x128xf32>
    %58 = vector.shape_cast %57 : vector<1x1x8x128xf32> to vector<8x128xf32>
    %59 = arith.addf %58, %56 : vector<8x128xf32>
    %c0_40 = arith.constant 0 : index
    %c3_41 = arith.constant 3 : index
    %c0_42 = arith.constant 0 : index
    %c0_43 = arith.constant 0 : index
    %60 = vector.load %arg4[%c0_40, %c3_41, %c0_42, %c0_43] : memref<1x6x8x128xf32, #tpu.memory_space<vmem>>, vector<1x1x8x128xf32>
    %61 = vector.shape_cast %60 : vector<1x1x8x128xf32> to vector<8x128xf32>
    %62 = vector.shape_cast %59 : vector<8x128xf32> to vector<1x1x8x128xf32>
    tpu.vector_store %arg4[%c0_40, %c3_41, %c0_42, %c0_43], %62 {strides = array<i32>} : memref<1x6x8x128xf32, #tpu.memory_space<vmem>>, vector<1x1x8x128xf32>,
    %63 = vector.shape_cast %29 : vector<16x128xf32> to vector<2x8x128xf32>
    %cst_44 = arith.constant dense<0.000000e+00> : vector<8x128xf32>
    %64 = vector.multi_reduction <add>, %63, %cst_44 [0] : vector<2x8x128xf32> to vector<8x128xf32>
    %c0_45 = arith.constant 0 : index
    %c4 = arith.constant 4 : index
    %c0_46 = arith.constant 0 : index
    %c0_47 = arith.constant 0 : index
    %65 = vector.load %arg4[%c0_45, %c4, %c0_46, %c0_47] : memref<1x6x8x128xf32, #tpu.memory_space<vmem>>, vector<1x1x8x128xf32>
    %66 = vector.shape_cast %65 : vector<1x1x8x128xf32> to vector<8x128xf32>
    %67 = arith.addf %66, %64 : vector<8x128xf32>
    %c0_48 = arith.constant 0 : index
    %c4_49 = arith.constant 4 : index
    %c0_50 = arith.constant 0 : index
    %c0_51 = arith.constant 0 : index
    %68 = vector.load %arg4[%c0_48, %c4_49, %c0_50, %c0_51] : memref<1x6x8x128xf32, #tpu.memory_space<vmem>>, vector<1x1x8x128xf32>
    %69 = vector.shape_cast %68 : vector<1x1x8x128xf32> to vector<8x128xf32>
    %70 = vector.shape_cast %67 : vector<8x128xf32> to vector<1x1x8x128xf32>
    tpu.vector_store %arg4[%c0_48, %c4_49, %c0_50, %c0_51], %70 {strides = array<i32>} : memref<1x6x8x128xf32, #tpu.memory_space<vmem>>, vector<1x1x8x128xf32>,
    %71 = vector.shape_cast %30 : vector<16x128xf32> to vector<2x8x128xf32>
    %cst_52 = arith.constant dense<0.000000e+00> : vector<8x128xf32>
    %72 = vector.multi_reduction <add>, %71, %cst_52 [0] : vector<2x8x128xf32> to vector<8x128xf32>
    %c0_53 = arith.constant 0 : index
    %c5 = arith.constant 5 : index
    %c0_54 = arith.constant 0 : index
    %c0_55 = arith.constant 0 : index
    %73 = vector.load %arg4[%c0_53, %c5, %c0_54, %c0_55] : memref<1x6x8x128xf32, #tpu.memory_space<vmem>>, vector<1x1x8x128xf32>
    %74 = vector.shape_cast %73 : vector<1x1x8x128xf32> to vector<8x128xf32>
    %75 = arith.addf %74, %72 : vector<8x128xf32>
    %c0_56 = arith.constant 0 : index
    %c5_57 = arith.constant 5 : index
    %c0_58 = arith.constant 0 : index
    %c0_59 = arith.constant 0 : index
    %76 = vector.load %arg4[%c0_56, %c5_57, %c0_58, %c0_59] : memref<1x6x8x128xf32, #tpu.memory_space<vmem>>, vector<1x1x8x128xf32>
    %77 = vector.shape_cast %76 : vector<1x1x8x128xf32> to vector<8x128xf32>
    %78 = vector.shape_cast %75 : vector<8x128xf32> to vector<1x1x8x128xf32>
    tpu.vector_store %arg4[%c0_56, %c5_57, %c0_58, %c0_59], %78 {strides = array<i32>} : memref<1x6x8x128xf32, #tpu.memory_space<vmem>>, vector<1x1x8x128xf32>,
    return
  }
  func.func @transform_0(%arg0: i32, %arg1: i32) -> (i32, i32) {
    %c1_i32 = arith.constant 1 : i32
    %0 = arith.muli %arg0, %c1_i32 : i32
    %1 = arith.addi %0, %arg1 : i32
    %c0_i32 = arith.constant 0 : i32
    %2 = arith.minsi %1, %c0_i32 : i32
    %c0_i32_0 = arith.constant 0 : i32
    %c0_i32_1 = arith.constant 0 : i32
    return %2, %c0_i32_0 : i32, i32
  }
  func.func @transform_1(%arg0: i32, %arg1: i32) -> (i32, i32) {
    %c1_i32 = arith.constant 1 : i32
    %0 = arith.muli %arg0, %c1_i32 : i32
    %1 = arith.addi %0, %arg1 : i32
    %c0_i32 = arith.constant 0 : i32
    %2 = arith.minsi %1, %c0_i32 : i32
    %c0_i32_0 = arith.constant 0 : i32
    %c0_i32_1 = arith.constant 0 : i32
    return %2, %c0_i32_0 : i32, i32
  }
  func.func @transform_2(%arg0: i32, %arg1: i32) -> (i32, i32, i32, i32) {
    %c0_i32 = arith.constant 0 : i32
    %c0_i32_0 = arith.constant 0 : i32
    %c0_i32_1 = arith.constant 0 : i32
    %c0_i32_2 = arith.constant 0 : i32
    return %arg0, %c0_i32, %c0_i32_0, %c0_i32_1 : i32, i32, i32, i32
  }
}

</mosaic_0001>

<llo_original>
// kernel: tpu_custom_call.1
$region0: #{tpu_custom_call.1}
  #allocation0 [shape = 'u32[]', space=smem, size = 0x4, offset = 0x4, fixed_abs, tag = 'smem constant byte address 0x4 - core index']
  #allocation1 [shape = 'u32[144,128]{1,0:T(1,128)}', space=vmem, size = 0x12000, scoped, tag = 'internal scratch']
  %s0 = inlined_call_operand.hbm [shape: f32[16,128], index: 0, kind: input, shape index: {}]
  %s1 = inlined_call_operand.hbm [shape: f32[16,128], index: 1, kind: input, shape index: {}]
  %s2 = inlined_call_operand.hbm [shape: f32[1,6,8,128], index: 2, kind: output, shape index: {}]
  %s3 = sld [smem:[#allocation0]]
  $region30: #{tpu_custom_call.1} parent=0
    _
  %s5 = ssub.s32 1, %s3
  %s6 = scalar_select 0, %s5, %s3
  $region1: #{tpu_custom_call.1} parent=0
    #allocation2 [shape = 'u8[8192]{0}', space=vmem, size = 0x2000, scoped, tag = 'input window, operand 0, single buffered']
    #allocation3 [shape = 's32[1]{0}', space=sflag, size = 0x4, scoped, tag = 'scoped memory for tpu_custom_call.1']
    #allocation4 [shape = 's32[1]{0}', space=sflag, size = 0x4, scoped, tag = 'scoped memory for tpu_custom_call.1']
    #allocation5 [shape = 'u8[8192]{0}', space=vmem, size = 0x2000, scoped, tag = 'input window, operand 1, single buffered']
    #allocation6 [shape = 's32[1]{0}', space=sflag, size = 0x4, scoped, tag = 'scoped memory for tpu_custom_call.1']
    #allocation7 [shape = 'u8[24576]{0}', space=vmem, size = 0x6000, scoped, tag = 'output window, operand 0, single buffered']
    %7 = vsyncpa [#allocation3], 0
    %8 = vsyncpa [#allocation6], 0
    %9 = vsyncpa [#allocation4], 0
    // Predicated region
    $region2: #{tpu_custom_call.1} parent=1 // pred_check
      _
    $region3: #{tpu_custom_call.1} parent=1 // pred_check_branch
      %11 = sbr.rel (0) target = $region5
    $region4: #{tpu_custom_call.1} parent=1 // pred_region
      %s12 = sadd.s32 0, 0
      %p13 = scmp.lt.s32.totalorder %s12, 0
      %s14 = scalar_select %p13, %s12, 0
      %s15 = smul.u32 2, %s14
      %s17 = ssub.s32 256, 256
      %18 = vsyncadd [#allocation3], %s17
      %s19 = smul.addr %s15, 128
      %s20 = scalar_lea.hbm %s0, %s19
      %s21 = sshll.u32 [#allocation2], 4
      %s22 = int_to_ptr.vmem [resolvable:$true] %s21
      %27 = dma.hbm_to_vmem [thread:$0]  %s20, 256, %s22, [#allocation3], 128, 128, 8
    $region5: #{tpu_custom_call.1} parent=1 // pred_fallthru
      _
    // Predicated region
    $region6: #{tpu_custom_call.1} parent=1 // pred_check
      _
    $region7: #{tpu_custom_call.1} parent=1 // pred_check_branch
      %29 = sbr.rel (0) target = $region9
    $region8: #{tpu_custom_call.1} parent=1 // pred_region
      %s30 = sadd.s32 0, 0
      %p31 = scmp.lt.s32.totalorder %s30, 0
      %s32 = scalar_select %p31, %s30, 0
      %s33 = smul.u32 2, %s32
      %s35 = ssub.s32 256, 256
      %36 = vsyncadd [#allocation6], %s35
      %s37 = smul.addr %s33, 128
      %s38 = scalar_lea.hbm %s1, %s37
      %s39 = sshll.u32 [#allocation5], 4
      %s40 = int_to_ptr.vmem [resolvable:$true] %s39
      %45 = dma.hbm_to_vmem [thread:$0]  %s38, 256, %s40, [#allocation6], 128, 128, 8
    $region9: #{tpu_custom_call.1} parent=1 // pred_fallthru
      _
    // Predicated region
    $region10: #{tpu_custom_call.1} parent=1 // pred_check
      _
    $region11: #{tpu_custom_call.1} parent=1 // pred_check_branch
      %47 = sbr.rel (0) target = $region13
    $region12: #{tpu_custom_call.1} parent=1 // pred_region
      %48 = dma.done [#allocation3], 256
    $region13: #{tpu_custom_call.1} parent=1 // pred_fallthru
      _
    // Predicated region
    $region14: #{tpu_custom_call.1} parent=1 // pred_check
      _
    $region15: #{tpu_custom_call.1} parent=1 // pred_check_branch
      %50 = sbr.rel (0) target = $region17
    $region16: #{tpu_custom_call.1} parent=1 // pred_region
      %51 = dma.done [#allocation6], 256
    $region17: #{tpu_custom_call.1} parent=1 // pred_fallthru
      _
    %s52 = sadd.s32 0, 0
    %p53 = scmp.lt.s32.totalorder %s52, 0
    %s54 = scalar_select %p53, %s52, 0
    %s55 = smul.u32 2, %s54
    %s56 = sadd.s32 0, 0
    %p57 = scmp.lt.s32.totalorder %s56, 0
    %s58 = scalar_select %p57, %s56, 0
    %s59 = smul.u32 2, %s58
    %p60 = scmp.eq.s32.totalorder 0, 0
    // Predicated region
    $region18: #{tpu_custom_call.1} parent=1 // pred_check
      %p61 = pneg %p60
    $region19: #{tpu_custom_call.1} parent=1 // pred_check_branch
      %63 = sbr.rel (%p61) target = $region21
    $region20: #{tpu_custom_call.1} parent=1 // pred_region
      %64 = vst [vmem:[#allocation7] sm:$0xff] 0.0
      %65 = vst [vmem:[#allocation7 + $0x8] sm:$0xff] 0.0
      %66 = vst [vmem:[#allocation7 + $0x10] sm:$0xff] 0.0
      %67 = vst [vmem:[#allocation7 + $0x18] sm:$0xff] 0.0
      %68 = vst [vmem:[#allocation7 + $0x20] sm:$0xff] 0.0
      %69 = vst [vmem:[#allocation7 + $0x28] sm:$0xff] 0.0
    $region21: #{tpu_custom_call.1} parent=1 // pred_fallthru
      _
    %v70 = vld [vmem:[#allocation2] sm:$0xff]
    %v71 = vld [vmem:[#allocation2 + $0x8] sm:$0xff]
    %v72 = vld [vmem:[#allocation5] sm:$0xff]
    %v73 = vld [vmem:[#allocation5 + $0x8] sm:$0xff]
    %v74 = vsub.f32 %v72, %v70
    %v75 = vsub.f32 %v73, %v71
    %v76 = vand.u32 2147483647, %v74
    %v77 = vand.u32 2147483647, %v75
    %v78 = vmul.f32 %v74, %v74
    %v79 = vmul.f32 %v75, %v75
    %v80 = vmax.f32 %v72, 0.0
    %v81 = vmax.f32 %v73, 0.0
    %v82 = vmin.f32 %v80, 1.0
    %v83 = vmin.f32 %v81, 1.0
    %v84 = vmax.f32 %v70, 0.0
    %v85 = vmax.f32 %v71, 0.0
    %v86 = vmin.f32 %v84, 1.0
    %v87 = vmin.f32 %v85, 1.0
    %v88 = vsub.f32 %v82, %v86
    %v89 = vsub.f32 %v83, %v87
    %v90 = vmul.f32 %v72, %v72
    %v91 = vmul.f32 %v73, %v73
    %v92 = vadd.f32 %v90, 0.01
    %v93 = vadd.f32 %v91, 0.01
    %v94 = vrcp.pop %v92
    %v95 = vmul.f32 %v78, %v94
    %v96 = vrcp.pop %v93
    %v97 = vmul.f32 %v79, %v96
    %v98 = vadd.f32 %v72, 0.01
    %v99 = vadd.f32 %v73, 0.01
    %v100 = vrcp.pop %v98
    %v101 = vmul.f32 %v76, %v100
    %v102 = vrcp.pop %v99
    %v103 = vmul.f32 %v77, %v102
    %v104 = vmul.f32 %v76, 2.0
    %v105 = vmul.f32 %v77, 2.0
    %v106 = vadd.f32 %v72, %v70
    %v107 = vadd.f32 %v73, %v71
    %v108 = vadd.f32 %v106, 0.01
    %v109 = vadd.f32 %v107, 0.01
    %v110 = vrcp.pop %v108
    %v111 = vmul.f32 %v104, %v110
    %v112 = vrcp.pop %v109
    %v113 = vmul.f32 %v105, %v112
    %v114 = vmul.f32 %v88, %v88
    %v115 = vmul.f32 %v89, %v89
    %v116 = vadd.f32 %v76, %v77
    %v117 = vld [vmem:[#allocation7] sm:$0xff]
    %v118 = vadd.f32 %v117, %v116
    %119 = vst [vmem:[#allocation7] sm:$0xff] %v118
    %v120 = vadd.f32 %v78, %v79
    %s121 = scalar_lea.vmem [#allocation7], 8
    %v122 = vld [vmem:[%s121] sm:$0xff]
    %v123 = vadd.f32 %v122, %v120
    %124 = vst [vmem:[%s121] sm:$0xff] %v123
    %v125 = vadd.f32 %v95, %v97
    %s126 = scalar_lea.vmem [#allocation7], 16
    %v127 = vld [vmem:[%s126] sm:$0xff]
    %v128 = vadd.f32 %v127, %v125
    %129 = vst [vmem:[%s126] sm:$0xff] %v128
    %v130 = vadd.f32 %v101, %v103
    %s131 = scalar_lea.vmem [#allocation7], 24
    %v132 = vld [vmem:[%s131] sm:$0xff]
    %v133 = vadd.f32 %v132, %v130
    %134 = vst [vmem:[%s131] sm:$0xff] %v133
    %v135 = vadd.f32 %v111, %v113
    %s136 = scalar_lea.vmem [#allocation7], 32
    %v137 = vld [vmem:[%s136] sm:$0xff]
    %v138 = vadd.f32 %v137, %v135
    %139 = vst [vmem:[%s136] sm:$0xff] %v138
    %v140 = vadd.f32 %v114, %v115
    %s141 = scalar_lea.vmem [#allocation7], 40
    %v142 = vld [vmem:[%s141] sm:$0xff]
    %v143 = vadd.f32 %v142, %v140
    %144 = vst [vmem:[%s141] sm:$0xff] %v143
    // Predicated region
    $region22: #{tpu_custom_call.1} parent=1 // pred_check
      _
    $region23: #{tpu_custom_call.1} parent=1 // pred_check_branch
      %146 = sbr.rel (0) target = $region25
    $region24: #{tpu_custom_call.1} parent=1 // pred_region
      %s148 = ssub.s32 768, 768
      %149 = vsyncadd [#allocation4], %s148
      %s150 = sshll.u32 [#allocation7], 4
      %s151 = int_to_ptr.vmem [resolvable:$true] %s150
      %156 = dma.vmem_to_hbm [thread:$0]  %s151, 768, %s2, [#allocation4], 128, 128, 8
    $region25: #{tpu_custom_call.1} parent=1 // pred_fallthru
      _
    // Predicated region
    $region26: #{tpu_custom_call.1} parent=1 // pred_check
      _
    $region27: #{tpu_custom_call.1} parent=1 // pred_check_branch
      %158 = sbr.rel (0) target = $region29
    $region28: #{tpu_custom_call.1} parent=1 // pred_region
      %159 = dma.done [#allocation4], 768
    $region29: #{tpu_custom_call.1} parent=1 // pred_fallthru
      _
    %160 = vsyncpa [#allocation3], 1
    %161 = vsyncpa [#allocation6], 1
    %162 = vsyncpa [#allocation4], 1

</llo_original>
